<compile_context>
chip_gen: v7x
topology: tpu7x:2x2x1
jax: 0.10.0
libtpu: 0.0.40
codegen_flags: <defaults>
</compile_context>

<pallas_src>
import functools

import jax
import jax.numpy as jnp
from jax import lax
from jax.experimental import pallas as pl
from jax.experimental.pallas import tpu as pltpu


def _self_attn_kernel(x_ref, wqkv_ref, mask_ref, o_ref, qkv_ref, *,
                      num_head, compute_dtype, approx_recip):
    # x_ref:    (1, D, L)   input slab for this batch element (NCL layout)
    # wqkv_ref: (3D, D)     fused [w_query*scale; w_key; w_value] weight
    # mask_ref: (1, 1, L)   key-validity mask (float 0/1)
    # o_ref:    (1, D, L)   attention output, channel-major (== NCL)
    # qkv_ref:  (3D, L)     f32 VMEM scratch holding the fused projection
    D = x_ref.shape[1]
    H = num_head
    d = D // H

    # Fused 1x1-conv Q/K/V projection for all heads in one MXU matmul
    # (compute_dtype operands, f32 accumulation). The f32 result lives only in
    # this scratch; per-head [d, L] slices are cast lazily below, so no
    # full-size duplicate copy stays live across the head loop.
    qkv_ref[...] = lax.dot_general(
        wqkv_ref[...], x_ref[0],
        dimension_numbers=(((1,), (0,)), ((), ())),
        preferred_element_type=jnp.float32)                           # [3D, L]

    # Additive key-mask bias, computed once (hoisted out of the head loop).
    # NOTE: an all-zero mask row degenerates to a uniform softmax, matching the
    # PyTorch module's mask_logits semantics (documented precondition).
    m = mask_ref[0].astype(jnp.float32)                               # [1, L]
    bias = jnp.where(m > 0.0, jnp.float32(0.0), jnp.float32(-1e30))   # [1, L]

    # Loop (not a static unroll) over heads so only one head's [L, L]
    # logits/exp/probs are live at a time -> bounded VMEM / vreg pressure.
    # TODO(synk): for very long L, add query tiling + online softmax (flash
    # style) so the per-head [L, L] block stays within v7x's 64 MiB VMEM.
    @pl.loop(0, H)
    def _head(h):
        q0 = pl.multiple_of(h * d, d)
        k0 = pl.multiple_of(D + h * d, d)
        v0 = pl.multiple_of(2 * D + h * d, d)
        q_h = qkv_ref[pl.ds(q0, d), :].astype(compute_dtype)          # [d, L]
        k_h = qkv_ref[pl.ds(k0, d), :].astype(compute_dtype)          # [d, L]
        v_h = qkv_ref[pl.ds(v0, d), :].astype(compute_dtype)          # [d, L]

        # logits[i, j] = sum_c q[c, i] * k[c, j]; the 1/sqrt(d) scale is
        # already folded into w_query on the host.
        logits = lax.dot_general(
            q_h, k_h, dimension_numbers=(((0,), (0,)), ((), ())),
            preferred_element_type=jnp.float32)                       # [L, L]
        logits = logits + bias

        # Softmax over the key dimension, kept in f32.
        mx = jnp.max(logits, axis=-1, keepdims=True)
        e = jnp.exp(logits - mx)
        s = jnp.sum(e, axis=-1, keepdims=True)
        if approx_recip:
            p = e * pl.reciprocal(s, approx=True)
        else:
            p = e / s   # exact division on the f32 structural-check path
        # TODO(synk): attention-weight dropout (F.dropout) is skipped (inference mode).

        # out[c, i] = sum_j v[c, j] * p[i, j]  -> channel-major, lands directly
        # in the module's [B, d_model, L] (NCL) layout with no transpose.
        out_h = lax.dot_general(
            v_h, p.astype(compute_dtype),
            dimension_numbers=(((1,), (1,)), ((), ())),
            preferred_element_type=jnp.float32)                       # [d, L]
        o_ref[0, pl.ds(q0, d), :] = out_h.astype(o_ref.dtype)


def self_attention_forward(x_ncl, mask, w_query, w_mem, num_head,
                           compute_dtype=jnp.bfloat16):
    """Pallas forward pass of SelfAttention (eval mode).

    x_ncl:   [B, d_model, L] float32 (PyTorch Conv1d NCL layout)
    mask:    [B, L]           key-validity mask (0/1); each row must have at
                              least one valid key (PyTorch-module precondition)
    w_query: [d_model, d_model]     (Conv1d k=1 weight, squeezed)
    w_mem:   [2*d_model, d_model]   (Conv1d k=1 weight, squeezed)
    returns: [B, d_model, L] float32
    """
    B, D, L = x_ncl.shape
    H = num_head
    assert D % H == 0, "d_model must be divisible by num_head"
    d = D // H
    scale = float(d) ** (-0.5)

    # Pad L to a lane-dense multiple of 128 (128-lane vreg axis). Padded key
    # columns are zero in the mask (-> masked out); padded query columns are
    # sliced off below.
    L_pad = L + ((-L) % 128)
    mask_f = mask.astype(jnp.float32)
    if L_pad != L:
        x_ncl = jnp.pad(x_ncl, ((0, 0), (0, 0), (0, L_pad - L)))
        mask_f = jnp.pad(mask_f, ((0, 0), (0, L_pad - L)))
    mask_f = mask_f.reshape(B, 1, L_pad)

    # Fold 1/sqrt(d) into w_query (done once on the host), fuse [Q; K; V]
    # weights, and DMA x + weight in compute_dtype (bf16 on the perf path).
    # Rows [0:D] -> Q, [D:2D] -> K, [2D:3D] -> V (matches torch.split order).
    w_qkv = jnp.concatenate([w_query * scale, w_mem], axis=0).astype(compute_dtype)
    x_c = x_ncl.astype(compute_dtype)

    cbytes = jnp.dtype(compute_dtype).itemsize

    # VMEM budget: real live set (double-buffered x/out/weight/mask blocks,
    # the f32 qkv scratch, and ONE head's logits/exp/probs) with 1.5x headroom,
    # capped below the physical VMEM of this generation.
    live_bytes = (
        2 * D * L_pad * cbytes            # x block (double-buffered)
        + 2 * D * L_pad * 4               # f32 output block (double-buffered)
        + 2 * 3 * D * D * cbytes          # fused weight (double-buffered)
        + 2 * L_pad * 4                   # mask block
        + 3 * D * L_pad * 4               # f32 qkv scratch
        + L_pad * L_pad * (4 + 4 + cbytes)  # logits + exp + probs (one head)
        + d * L_pad * 4                   # per-head output tile
    )
    try:
        phys_vmem = int(pltpu.get_tpu_info().vmem_capacity_bytes)
    except Exception:
        phys_vmem = 64 * 1024 * 1024      # conservative fallback (v7x per-TC)
    vmem_cap = int(phys_vmem * 0.85)      # leave headroom for compiler scratch
    vmem_limit = max(16 * 1024 * 1024, min(vmem_cap, int(live_bytes * 1.5)))

    # Advisory cost estimate so XLA can overlap neighboring ops.
    flops = B * (2 * (3 * D) * D * L_pad + 4 * D * L_pad * L_pad)
    transcendentals = B * H * L_pad * L_pad
    bytes_accessed = (B * D * L_pad * cbytes + 3 * D * D * cbytes
                      + B * L_pad * 4 + B * D * L_pad * 4)
    cost = pl.CostEstimate(flops=flops, transcendentals=transcendentals,
                           bytes_accessed=bytes_accessed)

    kernel = functools.partial(
        _self_attn_kernel, num_head=H, compute_dtype=compute_dtype,
        approx_recip=(jnp.dtype(compute_dtype) != jnp.dtype(jnp.float32)))

    out = pl.pallas_call(
        kernel,
        out_shape=jax.ShapeDtypeStruct((B, D, L_pad), jnp.float32),
        grid=(B,),
        in_specs=[
            pl.BlockSpec((1, D, L_pad), lambda b: (b, 0, 0)),   # x (NCL)
            # TODO(synk): this weight block is grid-constant; single-buffer it
            # (pipeline_mode=pl.Buffered(1)) to reclaim its second VMEM buffer.
            pl.BlockSpec((3 * D, D), lambda b: (0, 0)),          # fused QKV weight
            pl.BlockSpec((1, 1, L_pad), lambda b: (b, 0, 0)),    # key mask
        ],
        out_specs=pl.BlockSpec((1, D, L_pad), lambda b: (b, 0, 0)),
        scratch_shapes=[pltpu.VMEM((3 * D, L_pad), jnp.float32)],
        compiler_params=pltpu.CompilerParams(
            dimension_semantics=("parallel",),
            vmem_limit_bytes=vmem_limit),
        cost_estimate=cost,
    )(x_c, w_qkv, mask_f)
    return out[:, :, :L]


def _reference_forward(x_ncl, mask, w_query, w_mem, num_head):
    """Pure-JAX f32 reference mirroring the PyTorch module (eval mode)."""
    B, D, L = x_ncl.shape
    H = num_head
    d = D // H
    x = jnp.transpose(x_ncl, (0, 2, 1)).astype(jnp.float32)             # [B, L, D]
    query = jnp.einsum("bld,od->blo", x, w_query)                        # [B, L, D]
    memory = jnp.einsum("bld,od->blo", x, w_mem)                         # [B, L, 2D]
    k_proj, v_proj = memory[..., :D], memory[..., D:]

    def split(t):  # [B, L, D] -> [B, H, L, d]
        return jnp.transpose(t.reshape(B, L, H, d), (0, 2, 1, 3))

    Q = split(query) * (float(d) ** -0.5)
    K = split(k_proj)
    V = split(v_proj)
    logits = jnp.einsum("bhqd,bhkd->bhqk", Q, K)
    m = mask.astype(jnp.float32).reshape(B, 1, 1, L)
    logits = logits * m + (1.0 - m) * (-1e30)
    w = jax.nn.softmax(logits, axis=-1)
    o = jnp.einsum("bhqk,bhkd->bhqd", w, V)
    o = jnp.transpose(o, (0, 2, 1, 3)).reshape(B, L, D)
    return jnp.transpose(o, (0, 2, 1))


if __name__ == "__main__":
    B, d_model, L, num_head = 2, 32, 16, 4
    key = jax.random.PRNGKey(0)
    kx, kq, km = jax.random.split(key, 3)

    x = jax.random.normal(kx, (B, d_model, L), dtype=jnp.float32)

    # mask: valid key positions per batch element (lengths 12 and 16)
    lengths = jnp.array([12, 16], dtype=jnp.int32)
    mask = (jnp.arange(L)[None, :] < lengths[:, None]).astype(jnp.float32)

    # Deterministic xavier_uniform init (Conv1d weights, kernel_size=1, squeezed
    # to 2-D [out_channels, in_channels]).
    def xavier_uniform(k, out_ch, in_ch):
        bound = (6.0 / (in_ch + out_ch)) ** 0.5
        return jax.random.uniform(k, (out_ch, in_ch), jnp.float32, -bound, bound)

    w_query = xavier_uniform(kq, d_model, d_model)
    w_mem = xavier_uniform(km, 2 * d_model, d_model)
    # self.bias exists in the module but is unused (dot_product_attention bias=False).

    ref = _reference_forward(x, mask, w_query, w_mem, num_head)

    # f32 compute path: structural check (exact division, no approx reciprocal).
    out_f32 = self_attention_forward(x, mask, w_query, w_mem, num_head,
                                     compute_dtype=jnp.float32)
    out_f32 = jax.block_until_ready(out_f32)
    assert out_f32.shape == (B, d_model, L)
    assert jnp.allclose(out_f32, ref, atol=5e-3, rtol=5e-3), "f32 path mismatch"

    # bf16 MXU path (default / performance path): looser tolerance.
    out_bf16 = self_attention_forward(x, mask, w_query, w_mem, num_head)
    out_bf16 = jax.block_until_ready(out_bf16)
    assert out_bf16.shape == (B, d_model, L)
    assert jnp.allclose(out_bf16, ref, atol=5e-2, rtol=5e-2), "bf16 path mismatch"

    print("KERNEL_OK")
</pallas_src>

<mosaic_0001>
module attributes {stable_mosaic.version = 11 : i64} {
  func.func @_self_attn_kernel(%arg0: i32, %arg1: memref<1x32x128xf32, #tpu.memory_space<vmem>>, %arg2: memref<96x32xf32, #tpu.memory_space<vmem>>, %arg3: memref<1x1x128xf32, #tpu.memory_space<vmem>>, %arg4: memref<1x32x128xf32, #tpu.memory_space<vmem>>, %arg5: memref<96x128xf32, #tpu.memory_space<vmem>>) attributes {dimension_semantics = [#tpu.dimension_semantics<parallel>], iteration_bounds = array<i64: 2>, scalar_prefetch = 0 : i64, scratch_operands = 1 : i64, tpu.core_type = #tpu.core_type<tc>, window_params = [{transform_indices = @transform_0, window_bounds = array<i64: 1, 32, 128>}, {pipeline_mode = #tpu.pipeline_mode<synchronous>, transform_indices = @transform_1, window_bounds = array<i64: 96, 32>}, {transform_indices = @transform_2, window_bounds = array<i64: 1, 1, 128>}, {transform_indices = @transform_3, window_bounds = array<i64: 1, 32, 128>}]} {
    %c0 = arith.constant 0 : index
    %c0_0 = arith.constant 0 : index
    %0 = vector.load %arg2[%c0, %c0_0] : memref<96x32xf32, #tpu.memory_space<vmem>>, vector<96x32xf32>
    %c0_1 = arith.constant 0 : index
    %c0_2 = arith.constant 0 : index
    %c0_3 = arith.constant 0 : index
    %1 = vector.load %arg1[%c0_1, %c0_2, %c0_3] : memref<1x32x128xf32, #tpu.memory_space<vmem>>, vector<1x32x128xf32>
    %2 = vector.shape_cast %1 : vector<1x32x128xf32> to vector<32x128xf32>
    %cst = arith.constant dense<0.000000e+00> : vector<96x128xf32>
    %3 = tpu.matmul %0, %2, %cst {dimension_numbers = #tpu.dot_dimension_numbers<[1], [0], [0], [1], [0, 0, 1, 1], [], []>} : vector<96x32xf32>, vector<32x128xf32>, vector<96x128xf32> -> vector<96x128xf32>
    %c0_4 = arith.constant 0 : index
    %c0_5 = arith.constant 0 : index
    %4 = vector.load %arg5[%c0_4, %c0_5] : memref<96x128xf32, #tpu.memory_space<vmem>>, vector<96x128xf32>
    tpu.vector_store %arg5[%c0_4, %c0_5], %3 {strides = array<i32>} : memref<96x128xf32, #tpu.memory_space<vmem>>, vector<96x128xf32>,
    %c0_6 = arith.constant 0 : index
    %c0_7 = arith.constant 0 : index
    %c0_8 = arith.constant 0 : index
    %5 = vector.load %arg3[%c0_6, %c0_7, %c0_8] : memref<1x1x128xf32, #tpu.memory_space<vmem>>, vector<1x1x128xf32>
    %6 = vector.shape_cast %5 : vector<1x1x128xf32> to vector<1x128xf32>
    %cst_9 = arith.constant 0.000000e+00 : f32
    %7 = vector.broadcast %cst_9 : f32 to vector<1x128xf32>
    %8 = arith.cmpf ogt, %6, %7 : vector<1x128xf32>
    %cst_10 = arith.constant 0.000000e+00 : f32
    %cst_11 = arith.constant -1.000000e+30 : f32
    %9 = vector.broadcast %cst_10 : f32 to vector<1x128xf32>
    %10 = vector.broadcast %cst_11 : f32 to vector<1x128xf32>
    %11 = arith.select %8, %9, %10 : vector<1x128xi1>, vector<1x128xf32>
    %c0_i32 = arith.constant 0 : i32
    %c4_i32 = arith.constant 4 : i32
    %12 = arith.addi %c0_i32, %c4_i32 : i32
    %c1_i32 = arith.constant 1 : i32
    scf.for %arg6 = %c0_i32 to %12 step %c1_i32  : i32 {
      %c1_i32_13 = arith.constant 1 : i32
      %13 = arith.muli %arg6, %c1_i32_13 : i32
      %c0_i32_14 = arith.constant 0 : i32
      %14 = arith.addi %c0_i32_14, %13 : i32
      %c8_i32 = arith.constant 8 : i32
      %15 = arith.muli %14, %c8_i32 : i32
      %16 = tpu.assume_multiple %15, 8 : i32
      %c8_i32_15 = arith.constant 8 : i32
      %17 = arith.muli %14, %c8_i32_15 : i32
      %c32_i32 = arith.constant 32 : i32
      %18 = arith.addi %c32_i32, %17 : i32
      %19 = tpu.assume_multiple %18, 8 : i32
      %c8_i32_16 = arith.constant 8 : i32
      %20 = arith.muli %14, %c8_i32_16 : i32
      %c64_i32 = arith.constant 64 : i32
      %21 = arith.addi %c64_i32, %20 : i32
      %22 = tpu.assume_multiple %21, 8 : i32
      %23 = arith.index_cast %16 : i32 to index
      %c0_17 = arith.constant 0 : index
      %24 = vector.load %arg5[%23, %c0_17] : memref<96x128xf32, #tpu.memory_space<vmem>>, vector<8x128xf32>
      %25 = arith.index_cast %19 : i32 to index
      %c0_18 = arith.constant 0 : index
      %26 = vector.load %arg5[%25, %c0_18] : memref<96x128xf32, #tpu.memory_space<vmem>>, vector<8x128xf32>
      %27 = arith.index_cast %22 : i32 to index
      %c0_19 = arith.constant 0 : index
      %28 = vector.load %arg5[%27, %c0_19] : memref<96x128xf32, #tpu.memory_space<vmem>>, vector<8x128xf32>
      %cst_20 = arith.constant dense<0.000000e+00> : vector<128x128xf32>
      %29 = tpu.matmul %24, %26, %cst_20 {dimension_numbers = #tpu.dot_dimension_numbers<[0], [0], [1], [1], [0, 1, 1, 1], [], []>} : vector<8x128xf32>, vector<8x128xf32>, vector<128x128xf32> -> vector<128x128xf32>
      %30 = vector.broadcast %11 : vector<1x128xf32> to vector<128x128xf32>
      %31 = arith.addf %29, %30 : vector<128x128xf32>
      %cst_21 = arith.constant dense<0xFF800000> : vector<128xf32>
      %32 = vector.multi_reduction <maximumf>, %31, %cst_21 [1] : vector<128x128xf32> to vector<128xf32>
      %33 = vector.shape_cast %32 : vector<128xf32> to vector<128x1xf32>
      %34 = vector.broadcast %33 : vector<128x1xf32> to vector<128x128xf32>
      %35 = arith.subf %31, %34 : vector<128x128xf32>
      %36 = math.exp %35 : vector<128x128xf32>
      %cst_22 = arith.constant dense<0.000000e+00> : vector<128xf32>
      %37 = vector.multi_reduction <add>, %36, %cst_22 [1] : vector<128x128xf32> to vector<128xf32>
      %38 = vector.shape_cast %37 : vector<128xf32> to vector<128x1xf32>
      %39 = vector.broadcast %38 : vector<128x1xf32> to vector<128x128xf32>
      %40 = arith.divf %36, %39 : vector<128x128xf32>
      %cst_23 = arith.constant dense<0.000000e+00> : vector<8x128xf32>
      %41 = tpu.matmul %28, %40, %cst_23 {dimension_numbers = #tpu.dot_dimension_numbers<[1], [1], [0], [0], [0, 0, 1, 0], [], []>} : vector<8x128xf32>, vector<128x128xf32>, vector<8x128xf32> -> vector<8x128xf32>
      %c0_24 = arith.constant 0 : index
      %42 = arith.index_cast %16 : i32 to index
      %c0_25 = arith.constant 0 : index
      %43 = vector.load %arg4[%c0_24, %42, %c0_25] : memref<1x32x128xf32, #tpu.memory_space<vmem>>, vector<1x8x128xf32>
      %44 = vector.shape_cast %43 : vector<1x8x128xf32> to vector<8x128xf32>
      %45 = vector.shape_cast %41 : vector<8x128xf32> to vector<1x8x128xf32>
      tpu.vector_store %arg4[%c0_24, %42, %c0_25], %45 {strides = array<i32>} : memref<1x32x128xf32, #tpu.memory_space<vmem>>, vector<1x8x128xf32>,
    }
    %c4_i32_12 = arith.constant 4 : i32
    return
  }
  func.func @transform_0(%arg0: i32) -> (i32, i32, i32) {
    %c0_i32 = arith.constant 0 : i32
    %c0_i32_0 = arith.constant 0 : i32
    %c0_i32_1 = arith.constant 0 : i32
    return %arg0, %c0_i32, %c0_i32_0 : i32, i32, i32
  }
  func.func @transform_1(%arg0: i32) -> (i32, i32) {
    %c0_i32 = arith.constant 0 : i32
    %c0_i32_0 = arith.constant 0 : i32
    %c0_i32_1 = arith.constant 0 : i32
    return %c0_i32, %c0_i32_0 : i32, i32
  }
  func.func @transform_2(%arg0: i32) -> (i32, i32, i32) {
    %c0_i32 = arith.constant 0 : i32
    %c0_i32_0 = arith.constant 0 : i32
    %c0_i32_1 = arith.constant 0 : i32
    return %arg0, %c0_i32, %c0_i32_0 : i32, i32, i32
  }
  func.func @transform_3(%arg0: i32) -> (i32, i32, i32) {
    %c0_i32 = arith.constant 0 : i32
    %c0_i32_0 = arith.constant 0 : i32
    %c0_i32_1 = arith.constant 0 : i32
    return %arg0, %c0_i32, %c0_i32_0 : i32, i32, i32
  }
}

</mosaic_0001>

<llo_original>
// kernel: tpu_custom_call.1
$region0: #{tpu_custom_call.1}
  #allocation0 [shape = 'u32[]', space=smem, size = 0x4, offset = 0x4, fixed_abs, tag = 'smem constant byte address 0x4 - core index']
  #allocation1 [shape = 'u32[144,128]{1,0:T(1,128)}', space=vmem, size = 0x12000, scoped, tag = 'internal scratch']
  #allocation2 [shape = 'f32[96,128]{1,0:T(8,128)}', space=vmem, size = 0xc000, scoped, tag = 'scratch operand']
  %s0 = inlined_call_operand.vmem [shape: f32[2,32,128], index: 0, kind: input, shape index: {}]
  %s1 = inlined_call_operand.vmem [shape: f32[96,32], index: 1, kind: input, shape index: {}]
  %s2 = inlined_call_operand.vmem [shape: f32[2,1,128], index: 2, kind: input, shape index: {}]
  %s3 = inlined_call_operand.hbm [shape: f32[2,32,128], index: 3, kind: output, shape index: {}]
  %s4 = sld [smem:[#allocation0]]
  $region52: #{tpu_custom_call.1} parent=0
    _
  %s6 = ssub.s32 1, %s4
  %s7 = scalar_select 0, %s6, %s4
  $region1: #{tpu_custom_call.1} parent=0
    #allocation3 [shape = 'u8[32768]{0}', space=vmem, size = 0x8000, scoped, tag = 'output window, operand 0']
    #allocation4 [shape = 's32[2]{0}', space=sflag, size = 0x8, scoped, tag = 'scoped memory for tpu_custom_call.1']
    %8 = vsyncpa [#allocation4], 0
    %s9 = scalar_lea.sflag [#allocation4], 1
    %10 = vsyncpa %s9, 0
    loop: start=0, step=1, limit=4
    $region2: #{tpu_custom_call.1} parent=1 // loop_pre_header
      _
    $region3: #{tpu_custom_call.1} parent=1 // loop_header
      %s12 = sphi 0, %s16
      %p13 = scmp.ge.s32.totalorder %s12, 4
      %s22 = sphi 0, %s24
      %s25 = sphi 0, %s22
      %s26 = sphi 0, %s25
      %s42 = sphi 0, %s26
      %s46 = sphi 0, %s46
      %s48 = sphi 0, %s46
      %s49 = sphi 0, %s48
      %s63 = sphi 0, %s49
      %s69 = sphi 0, %s71
      %s72 = sphi 0, %s69
      %s73 = sphi 0, %s72
      %s89 = sphi 0, %s73
      %s95 = sphi 0, %s97
      %s98 = sphi 0, %s95
      %s99 = sphi 0, %s98
      %s115 = sphi 0, %s99
    $region4: #{tpu_custom_call.1} parent=1 // loop_header_branch
      %15 = sbr.rel (%p13) target = $region8
    $region5: #{tpu_custom_call.1} parent=1 // loop_body
      %s17 = ssub.s32 %s12, 1
      %s18 = ssub.s32 %s12, 2
      %s19 = sadd.s32 %s12, 1
      %s20 = ssub.s32 %s12, %s19
      %p21 = scmp.eq.s32.totalorder %s20, 0
      %s23 = sadd.s32 %s22, 1
      %s24 = scalar_select %p21, %s22, %s23
      %p27 = pneg %p21
      %p28 = scmp.eq.s32.totalorder %s12, 1
      %p29 = por %p27, %p28
      %p30 = scmp.ne.s32.totalorder %s22, %s25
      %p31 = scmp.eq.s32.totalorder %s12, 0
      %p32 = por %p30, %p31
      %p33 = scmp.ne.s32.totalorder %s22, %s25
      %p34 = scmp.eq.s32.totalorder %s17, 1
      %p35 = por %p33, %p34
      %p36 = scmp.ne.s32.totalorder %s25, %s26
      %p37 = scmp.eq.s32.totalorder %s17, 0
      %p38 = por %p36, %p37
      %p39 = scmp.ne.s32.totalorder %s25, %s26
      %p40 = scmp.eq.s32.totalorder %s18, 1
      %p41 = por %p39, %p40
      %p43 = scmp.ne.s32.totalorder %s26, %s42
      %p44 = scmp.eq.s32.totalorder %s18, 0
      %p45 = por %p43, %p44
      %s47 = sadd.s32 %s46, 1
      %p50 = scmp.eq.s32.totalorder %s12, 1
      %p51 = scmp.ne.s32.totalorder %s46, %s48
      %p52 = scmp.eq.s32.totalorder %s12, 0
      %p53 = por %p51, %p52
      %p54 = scmp.ne.s32.totalorder %s46, %s48
      %p55 = scmp.eq.s32.totalorder %s17, 1
      %p56 = por %p54, %p55
      %p57 = scmp.ne.s32.totalorder %s48, %s49
      %p58 = scmp.eq.s32.totalorder %s17, 0
      %p59 = por %p57, %p58
      %p60 = scmp.ne.s32.totalorder %s48, %s49
      %p61 = scmp.eq.s32.totalorder %s18, 1
      %p62 = por %p60, %p61
      %p64 = scmp.ne.s32.totalorder %s49, %s63
      %p65 = scmp.eq.s32.totalorder %s18, 0
      %p66 = por %p64, %p65
      %s67 = ssub.s32 %s12, %s19
      %p68 = scmp.eq.s32.totalorder %s67, 0
      %s70 = sadd.s32 %s69, 1
      %s71 = scalar_select %p68, %s69, %s70
      %p74 = pneg %p68
      %p75 = scmp.eq.s32.totalorder %s12, 1
      %p76 = por %p74, %p75
      %p77 = scmp.ne.s32.totalorder %s69, %s72
      %p78 = scmp.eq.s32.totalorder %s12, 0
      %p79 = por %p77, %p78
      %p80 = scmp.ne.s32.totalorder %s69, %s72
      %p81 = scmp.eq.s32.totalorder %s17, 1
      %p82 = por %p80, %p81
      %p83 = scmp.ne.s32.totalorder %s72, %s73
      %p84 = scmp.eq.s32.totalorder %s17, 0
      %p85 = por %p83, %p84
      %p86 = scmp.ne.s32.totalorder %s72, %s73
      %p87 = scmp.eq.s32.totalorder %s18, 1
      %p88 = por %p86, %p87
      %p90 = scmp.ne.s32.totalorder %s73, %s89
      %p91 = scmp.eq.s32.totalorder %s18, 0
      %p92 = por %p90, %p91
      %s93 = ssub.s32 %s12, %s19
      %p94 = scmp.eq.s32.totalorder %s93, 0
      %s96 = sadd.s32 %s95, 1
      %s97 = scalar_select %p94, %s95, %s96
      %p100 = pneg %p94
      %p101 = scmp.eq.s32.totalorder %s12, 1
      %p102 = por %p100, %p101
      %p103 = scmp.ne.s32.totalorder %s95, %s98
      %p104 = scmp.eq.s32.totalorder %s12, 0
      %p105 = por %p103, %p104
      %p106 = scmp.ne.s32.totalorder %s95, %s98
      %p107 = scmp.eq.s32.totalorder %s17, 1
      %p108 = por %p106, %p107
      %p109 = scmp.ne.s32.totalorder %s98, %s99
      %p110 = scmp.eq.s32.totalorder %s17, 0
      %p111 = por %p109, %p110
      %p112 = scmp.ne.s32.totalorder %s98, %s99
      %p113 = scmp.eq.s32.totalorder %s18, 1
      %p114 = por %p112, %p113
      %p116 = scmp.ne.s32.totalorder %s99, %s115
      %p117 = scmp.eq.s32.totalorder %s18, 0
      %p118 = por %p116, %p117
      %p119 = scmp.le.s32.totalorder 1, %s12
      %p120 = scmp.lt.s32.totalorder %s12, 3
      %p121 = pnand %p119, %p120
      %p122 = pneg %p121
      // Predicated region
      $region9: #{tpu_custom_call.1} parent=5 // pred_check
        _
      $region10: #{tpu_custom_call.1} parent=5 // pred_check_branch
        %124 = sbr.rel (%p121) target = $region12
      $region11: #{tpu_custom_call.1} parent=5 // pred_region
        %s125 = ssub.s32 %s12, 1
        // Predicated region
        $region13: #{tpu_custom_call.1} parent=11 // pred_check
          %p126 = pneg %p59
        $region14: #{tpu_custom_call.1} parent=11 // pred_check_branch
          %128 = sbr.rel (%p126) target = $region16
        $region15: #{tpu_custom_call.1} parent=11 // pred_region
          _
        $region16: #{tpu_custom_call.1} parent=11 // pred_fallthru
          _
      $region12: #{tpu_custom_call.1} parent=5 // pred_fallthru
        _
      %p129 = scmp.lt.s32.totalorder %s12, 2
      // Predicated region
      $region17: #{tpu_custom_call.1} parent=5 // pred_check
        %p130 = pneg %p129
      $region18: #{tpu_custom_call.1} parent=5 // pred_check_branch
        %132 = sbr.rel (%p130) target = $region20
      $region19: #{tpu_custom_call.1} parent=5 // pred_region
        // Predicated region
        $region21: #{tpu_custom_call.1} parent=19 // pred_check
          %p133 = pneg %p32
        $region22: #{tpu_custom_call.1} parent=19 // pred_check_branch
          %135 = sbr.rel (%p133) target = $region24
        $region23: #{tpu_custom_call.1} parent=19 // pred_region
          %p136 = scmp.lt.s32.totalorder %s12, 1
          %s137 = scalar_select %p136, %s12, 1
          %s138 = smul.addr %s137, 4
          %s139 = smul.addr %s138, 8
          %s140 = scalar_lea.vmem %s0, %s139
        $region24: #{tpu_custom_call.1} parent=19 // pred_fallthru
          _
        // Predicated region
        $region25: #{tpu_custom_call.1} parent=19 // pred_check
          %p141 = pneg %p79
        $region26: #{tpu_custom_call.1} parent=19 // pred_check_branch
          %143 = sbr.rel (%p141) target = $region28
        $region27: #{tpu_custom_call.1} parent=19 // pred_region
          %p144 = scmp.lt.s32.totalorder %s12, 1
          %s145 = scalar_select %p144, %s12, 1
          %s146 = scalar_lea.vmem %s2, %s145
        $region28: #{tpu_custom_call.1} parent=19 // pred_fallthru
          _
      $region20: #{tpu_custom_call.1} parent=5 // pred_fallthru
        _
      %p147 = scmp.le.s32.totalorder 1, %s12
      %p148 = scmp.lt.s32.totalorder %s12, 3
      %p149 = pnand %p147, %p148
      %p150 = pneg %p149
      // Predicated region
      $region29: #{tpu_custom_call.1} parent=5 // pred_check
        _
      $region30: #{tpu_custom_call.1} parent=5 // pred_check_branch
        %152 = sbr.rel (%p149) target = $region32
      $region31: #{tpu_custom_call.1} parent=5 // pred_region
        %s153 = ssub.s32 %s12, 1
        %p154 = scmp.lt.s32.totalorder %s17, 1
        %s155 = scalar_select %p154, %s17, 1
        %s156 = smul.addr %s155, 4
        %s157 = smul.addr %s156, 8
        %s158 = scalar_lea.vmem %s0, %s157
        %p159 = pneg %p38
        %p160 = pneg %p35
        %p161 = pneg %p59
        %p162 = pneg %p56
        %p163 = scmp.lt.s32.totalorder %s17, 1
        %s164 = scalar_select %p163, %s17, 1
        %s165 = scalar_lea.vmem %s2, %s164
        %p166 = pneg %p85
        %p167 = pneg %p82
        %p168 = pneg %p111
        %p169 = pneg %p108
        %s170 = sand.u32 %s98, 1
        %s171 = scalar_lea.sflag [#allocation4], %s170
        %s172 = sand.u32 %s98, 1
        %s173 = smul.addr %s172, 32
        %s174 = scalar_lea.vmem [#allocation3], %s173
        %p175 = scmp.lt.s32.totalorder %s17, 1
        %s176 = scalar_select %p175, %s17, 1
        %s177 = smul.addr %s176, 4
        %s178 = smul.addr %s177, 8
        %s179 = scalar_lea.vmem %s0, %s178
        %p180 = scmp.lt.s32.totalorder %s17, 1
        %s181 = scalar_select %p180, %s17, 1
        %s182 = scalar_lea.vmem %s2, %s181
        %v183 = vld [vmem:[%s1] sm:$0xff]
        %v184 = vld [vmem:[%s1 + $0x8] sm:$0xff]
        %v185 = vld [vmem:[%s1 + $0x10] sm:$0xff]
        %v186 = vld [vmem:[%s1 + $0x18] sm:$0xff]
        %v187 = vld [vmem:[%s1 + $0x20] sm:$0xff]
        %v188 = vld [vmem:[%s1 + $0x28] sm:$0xff]
        %v189 = vld [vmem:[%s1 + $0x30] sm:$0xff]
        %v190 = vld [vmem:[%s1 + $0x38] sm:$0xff]
        %v191 = vld [vmem:[%s1 + $0x40] sm:$0xff]
        %v192 = vld [vmem:[%s1 + $0x48] sm:$0xff]
        %v193 = vld [vmem:[%s1 + $0x50] sm:$0xff]
        %v194 = vld [vmem:[%s1 + $0x58] sm:$0xff]
        %v195 = vld [vmem:[%s179] sm:$0xff]
        %v196 = vld [vmem:[%s179 + $0x8] sm:$0xff]
        %v197 = vld [vmem:[%s179 + $0x10] sm:$0xff]
        %v198 = vld [vmem:[%s179 + $0x18] sm:$0xff]
        %vm199 = vcmask 261120
        %v201 = vsel %vm199, %v183, 0
        %v204 = vsel %vm199, %v184, 0
        %v207 = vsel %vm199, %v185, 0
        %v210 = vsel %vm199, %v186, 0
        %v213 = vsel %vm199, %v187, 0
        %v216 = vsel %vm199, %v188, 0
        %v219 = vsel %vm199, %v189, 0
        %v222 = vsel %vm199, %v190, 0
        %v225 = vsel %vm199, %v191, 0
        %v228 = vsel %vm199, %v192, 0
        %v231 = vsel %vm199, %v193, 0
        %v234 = vsel %vm199, %v194, 0
        %236 = vmatprep.subr.mxu0 0.0
        %237 = vmatpush1.msra.mxu0 %v195
        %238 = vmatprep.subr.mxu0 0.0
        %239 = vmatpush1.msra.mxu0 %v196
        %240 = vmatprep.subr.mxu0 0.0
        %241 = vmatpush1.msra.mxu0 %v197
        %242 = vmatprep.subr.mxu0 0.0
        %243 = vmatpush1.msra.mxu0 %v198
        %244 = vmatprep.subr.mxu0 0.0
        %245 = vmatpush1.msra.mxu0 0.0
        %246 = vmatprep.subr.mxu0 0.0
        %247 = vmatpush1.msra.mxu0 0.0
        %248 = vmatprep.subr.mxu0 0.0
        %249 = vmatpush1.msra.mxu0 0.0
        %250 = vmatprep.subr.mxu0 0.0
        %251 = vmatpush1.msra.mxu0 0.0
        %252 = vmatprep.subr.mxu0 0.0
        %253 = vmatpush1.msra.mxu0 0.0
        %254 = vmatprep.subr.mxu0 0.0
        %255 = vmatpush1.msra.mxu0 0.0
        %256 = vmatprep.subr.mxu0 0.0
        %257 = vmatpush1.msra.mxu0 0.0
        %258 = vmatprep.subr.mxu0 0.0
        %259 = vmatpush1.msra.mxu0 0.0
        %260 = vmatprep.subr.mxu0 0.0
        %261 = vmatpush1.msra.mxu0 0.0
        %262 = vmatprep.subr.mxu0 0.0
        %263 = vmatpush1.msra.mxu0 0.0
        %264 = vmatprep.subr.mxu0 0.0
        %265 = vmatpush1.msra.mxu0 0.0
        %266 = vmatprep.subr.mxu0 0.0
        %267 = vmatpush1.msra.mxu0 0.0
        %268 = vmatprep.subr.mxu0 0.0
        %269 = vmatpush1.msra.mxu0 0.0
        %270 = vmatprep.subr.mxu0 0.0
        %271 = vmatpush1.msra.mxu0 0.0
        %272 = vmatprep.subr.mxu0 0.0
        %273 = vmatpush1.msra.mxu0 0.0
        %274 = vmatprep.subr.mxu0 0.0
        %275 = vmatpush1.msra.mxu0 0.0
        %276 = vmatprep.subr.mxu0 0.0
        %277 = vmatpush1.msra.mxu0 0.0
        %278 = vmatprep.subr.mxu0 0.0
        %279 = vmatpush1.msra.mxu0 0.0
        %280 = vmatprep.subr.mxu0 0.0
        %281 = vmatpush1.msra.mxu0 0.0
        %282 = vmatprep.subr.mxu0 0.0
        %283 = vmatpush1.msra.mxu0 0.0
        %284 = vmatprep.subr.mxu0 0.0
        %285 = vmatpush1.msra.mxu0 0.0
        %286 = vmatprep.subr.mxu0 0.0
        %287 = vmatpush1.msra.mxu0 0.0
        %288 = vmatprep.subr.mxu0 0.0
        %289 = vmatpush1.msra.mxu0 0.0
        %290 = vmatprep.subr.mxu0 0.0
        %291 = vmatpush1.msra.mxu0 0.0
        %292 = vmatprep.subr.mxu0 0.0
        %293 = vmatpush1.msra.mxu0 0.0
        %294 = vmatprep.subr.mxu0 0.0
        %295 = vmatpush1.msra.mxu0 0.0
        %296 = vmatprep.subr.mxu0 0.0
        %297 = vmatpush1.msra.mxu0 0.0
        %298 = vmatprep.subr.mxu0 0.0
        %299 = vmatpush1.msra.mxu0 0.0
        %300 = vmatprep.mubr.f32.mxu0 0.0
        %301 = vmatmul.mubr.f32.gmra.mrb[0].mxu0 %v201
        %v302 = vpop.f32.mrb[0].mxu0
        %v303 = vadd.f32 0.0, %v302
        %v304 = vpop.f32.mrb[0].mxu0
        %305 = vmatprep.mubr.f32.mxu0 0.0
        %306 = vmatmul.mubr.f32.gmra.mrb[0].mxu0 %v204
        %v307 = vpop.f32.mrb[0].mxu0
        %v308 = vadd.f32 0.0, %v307
        %v309 = vpop.f32.mrb[0].mxu0
        %310 = vmatprep.mubr.f32.mxu0 0.0
        %311 = vmatmul.mubr.f32.gmra.mrb[0].mxu0 %v207
        %v312 = vpop.f32.mrb[0].mxu0
        %v313 = vadd.f32 0.0, %v312
        %v314 = vpop.f32.mrb[0].mxu0
        %315 = vmatprep.mubr.f32.mxu0 0.0
        %316 = vmatmul.mubr.f32.gmra.mrb[0].mxu0 %v210
        %v317 = vpop.f32.mrb[0].mxu0
        %v318 = vadd.f32 0.0, %v317
        %v319 = vpop.f32.mrb[0].mxu0
        %320 = vmatprep.mubr.f32.mxu0 0.0
        %321 = vmatmul.mubr.f32.gmra.mrb[0].mxu0 %v213
        %v322 = vpop.f32.mrb[0].mxu0
        %v323 = vadd.f32 0.0, %v322
        %v324 = vpop.f32.mrb[0].mxu0
        %325 = vmatprep.mubr.f32.mxu0 0.0
        %326 = vmatmul.mubr.f32.gmra.mrb[0].mxu0 %v216
        %v327 = vpop.f32.mrb[0].mxu0
        %v328 = vadd.f32 0.0, %v327
        %v329 = vpop.f32.mrb[0].mxu0
        %330 = vmatprep.mubr.f32.mxu0 0.0
        %331 = vmatmul.mubr.f32.gmra.mrb[0].mxu0 %v219
        %v332 = vpop.f32.mrb[0].mxu0
        %v333 = vadd.f32 0.0, %v332
        %v334 = vpop.f32.mrb[0].mxu0
        %335 = vmatprep.mubr.f32.mxu0 0.0
        %336 = vmatmul.mubr.f32.gmra.mrb[0].mxu0 %v222
        %v337 = vpop.f32.mrb[0].mxu0
        %v338 = vadd.f32 0.0, %v337
        %v339 = vpop.f32.mrb[0].mxu0
        %340 = vmatprep.mubr.f32.mxu0 0.0
        %341 = vmatmul.mubr.f32.gmra.mrb[0].mxu0 %v225
        %v342 = vpop.f32.mrb[0].mxu0
        %v343 = vadd.f32 0.0, %v342
        %v344 = vpop.f32.mrb[0].mxu0
        %345 = vmatprep.mubr.f32.mxu0 0.0
        %346 = vmatmul.mubr.f32.gmra.mrb[0].mxu0 %v228
        %v347 = vpop.f32.mrb[0].mxu0
        %v348 = vadd.f32 0.0, %v347
        %v349 = vpop.f32.mrb[0].mxu0
        %350 = vmatprep.mubr.f32.mxu0 0.0
        %351 = vmatmul.mubr.f32.gmra.mrb[0].mxu0 %v231
        %v352 = vpop.f32.mrb[0].mxu0
        %v353 = vadd.f32 0.0, %v352
        %v354 = vpop.f32.mrb[0].mxu0
        %355 = vmatprep.mubr.f32.mxu0 0.0
        %356 = vmatmul.mubr.f32.gmra.mrb[0].mxu0 %v234
        %v357 = vpop.f32.mrb[0].mxu0
        %v358 = vadd.f32 0.0, %v357
        %v359 = vpop.f32.mrb[0].mxu0
        %360 = vdwg.mxu0
        %361 = vst [vmem:[#allocation2] sm:$0xff] %v303
        %362 = vst [vmem:[#allocation2 + $0x8] sm:$0xff] %v308
        %363 = vst [vmem:[#allocation2 + $0x10] sm:$0xff] %v313
        %364 = vst [vmem:[#allocation2 + $0x18] sm:$0xff] %v318
        %365 = vst [vmem:[#allocation2 + $0x20] sm:$0xff] %v323
        %366 = vst [vmem:[#allocation2 + $0x28] sm:$0xff] %v328
        %367 = vst [vmem:[#allocation2 + $0x30] sm:$0xff] %v333
        %368 = vst [vmem:[#allocation2 + $0x38] sm:$0xff] %v338
        %369 = vst [vmem:[#allocation2 + $0x40] sm:$0xff] %v343
        %370 = vst [vmem:[#allocation2 + $0x48] sm:$0xff] %v348
        %371 = vst [vmem:[#allocation2 + $0x50] sm:$0xff] %v353
        %372 = vst [vmem:[#allocation2 + $0x58] sm:$0xff] %v358
        %v373 = vld [vmem:[%s182] sm:$0x1]
        %vm374 = vcmp.gt.f32.partialorder %v373, 0.0
        %v375 = vsel %vm374, 0.0, -1e+30
        loop: start=0, step=1, limit=4
        $region33: #{tpu_custom_call.1} parent=31 // loop_pre_header
          _
        $region34: #{tpu_custom_call.1} parent=31 // loop_header
          %s377 = sphi 0, %s381
          %p378 = scmp.ge.s32.totalorder %s377, 4
        $region35: #{tpu_custom_call.1} parent=31 // loop_header_branch
          %380 = sbr.rel (%p378) target = $region39
        $region36: #{tpu_custom_call.1} parent=31 // loop_body
          %s382 = smul.u32 %s377, 8
          %s383 = sadd.s32 %s382, 32
          %s384 = sadd.s32 %s382, 64
          %s385 = scalar_lea.vmem [#allocation2], %s382
          %v386 = vld [vmem:[%s385] sm:$0xff]
          %s387 = scalar_lea.vmem [#allocation2], %s383
          %v388 = vld [vmem:[%s387] sm:$0xff]
          %s389 = scalar_lea.vmem [#allocation2], %s384
          %v390 = vld [vmem:[%s389] sm:$0xff]
          %v392 = vlaneseq
          %v393 = vshrl.u32 %v392, 7
          %v394 = vsub.s32 0, %v393
          %v395 = vrot.slane %v375, %v394
          %397 = vxpose.xlu0.b32.start [1/16] %v386, 128
          %398 = vxpose.xlu0.b32.cont [2/16] 0.0, 128
          %399 = vxpose.xlu0.b32.cont [3/16] 0.0, 128
          %400 = vxpose.xlu0.b32.cont [4/16] 0.0, 128
          %401 = vxpose.xlu0.b32.cont [5/16] 0.0, 128
          %402 = vxpose.xlu0.b32.cont [6/16] 0.0, 128
          %403 = vxpose.xlu0.b32.cont [7/16] 0.0, 128
          %404 = vxpose.xlu0.b32.cont [8/16] 0.0, 128
          %405 = vxpose.xlu0.b32.cont [9/16] 0.0, 128
          %406 = vxpose.xlu0.b32.cont [10/16] 0.0, 128
          %407 = vxpose.xlu0.b32.cont [11/16] 0.0, 128
          %408 = vxpose.xlu0.b32.cont [12/16] 0.0, 128
          %409 = vxpose.xlu0.b32.cont [13/16] 0.0, 128
          %410 = vxpose.xlu0.b32.cont [14/16] 0.0, 128
          %411 = vxpose.xlu0.b32.cont [15/16] 0.0, 128
          %412 = vxpose.xlu0.b32.end [16/16] 0.0, 128
          %v413 = vpop.trf.xlu0
          %v414 = vpop.trf.xlu0
          %v415 = vpop.trf.xlu0
          %v416 = vpop.trf.xlu0
          %v417 = vpop.trf.xlu0
          %v418 = vpop.trf.xlu0
          %v419 = vpop.trf.xlu0
          %v420 = vpop.trf.xlu0
          %v421 = vpop.trf.xlu0
          %v422 = vpop.trf.xlu0
          %v423 = vpop.trf.xlu0
          %v424 = vpop.trf.xlu0
          %v425 = vpop.trf.xlu0
          %v426 = vpop.trf.xlu0
          %v427 = vpop.trf.xlu0
          %v428 = vpop.trf.xlu0
          %vm429 = vcmask 64512
          %v431 = vsel %vm429, %v413, 0
          %v434 = vsel %vm429, %v414, 0
          %v437 = vsel %vm429, %v415, 0
          %v440 = vsel %vm429, %v416, 0
          %v443 = vsel %vm429, %v417, 0
          %v446 = vsel %vm429, %v418, 0
          %v449 = vsel %vm429, %v419, 0
          %v452 = vsel %vm429, %v420, 0
          %v455 = vsel %vm429, %v421, 0
          %v458 = vsel %vm429, %v422, 0
          %v461 = vsel %vm429, %v423, 0
          %v464 = vsel %vm429, %v424, 0
          %v467 = vsel %vm429, %v425, 0
          %v470 = vsel %vm429, %v426, 0
          %v473 = vsel %vm429, %v427, 0
          %v476 = vsel %vm429, %v428, 0
          %478 = vmatprep.subr.mxu0 0.0
          %479 = vmatpush1.msra.mxu0 %v388
          %480 = vmatprep.subr.mxu0 0.0
          %481 = vmatpush1.msra.mxu0 0.0
          %482 = vmatprep.subr.mxu0 0.0
          %483 = vmatpush1.msra.mxu0 0.0
          %484 = vmatprep.subr.mxu0 0.0
          %485 = vmatpush1.msra.mxu0 0.0
          %486 = vmatprep.subr.mxu0 0.0
          %487 = vmatpush1.msra.mxu0 0.0
          %488 = vmatprep.subr.mxu0 0.0
          %489 = vmatpush1.msra.mxu0 0.0
          %490 = vmatprep.subr.mxu0 0.0
          %491 = vmatpush1.msra.mxu0 0.0
          %492 = vmatprep.subr.mxu0 0.0
          %493 = vmatpush1.msra.mxu0 0.0
          %494 = vmatprep.subr.mxu0 0.0
          %495 = vmatpush1.msra.mxu0 0.0
          %496 = vmatprep.subr.mxu0 0.0
          %497 = vmatpush1.msra.mxu0 0.0
          %498 = vmatprep.subr.mxu0 0.0
          %499 = vmatpush1.msra.mxu0 0.0
          %500 = vmatprep.subr.mxu0 0.0
          %501 = vmatpush1.msra.mxu0 0.0
          %502 = vmatprep.subr.mxu0 0.0
          %503 = vmatpush1.msra.mxu0 0.0
          %504 = vmatprep.subr.mxu0 0.0
          %505 = vmatpush1.msra.mxu0 0.0
          %506 = vmatprep.subr.mxu0 0.0
          %507 = vmatpush1.msra.mxu0 0.0
          %508 = vmatprep.subr.mxu0 0.0
          %509 = vmatpush1.msra.mxu0 0.0
          %510 = vmatprep.subr.mxu0 0.0
          %511 = vmatpush1.msra.mxu0 0.0
          %512 = vmatprep.subr.mxu0 0.0
          %513 = vmatpush1.msra.mxu0 0.0
          %514 = vmatprep.subr.mxu0 0.0
          %515 = vmatpush1.msra.mxu0 0.0
          %516 = vmatprep.subr.mxu0 0.0
          %517 = vmatpush1.msra.mxu0 0.0
          %518 = vmatprep.subr.mxu0 0.0
          %519 = vmatpush1.msra.mxu0 0.0
          %520 = vmatprep.subr.mxu0 0.0
          %521 = vmatpush1.msra.mxu0 0.0
          %522 = vmatprep.subr.mxu0 0.0
          %523 = vmatpush1.msra.mxu0 0.0
          %524 = vmatprep.subr.mxu0 0.0
          %525 = vmatpush1.msra.mxu0 0.0
          %526 = vmatprep.subr.mxu0 0.0
          %527 = vmatpush1.msra.mxu0 0.0
          %528 = vmatprep.subr.mxu0 0.0
          %529 = vmatpush1.msra.mxu0 0.0
          %530 = vmatprep.subr.mxu0 0.0
          %531 = vmatpush1.msra.mxu0 0.0
          %532 = vmatprep.subr.mxu0 0.0
          %533 = vmatpush1.msra.mxu0 0.0
          %534 = vmatprep.subr.mxu0 0.0
          %535 = vmatpush1.msra.mxu0 0.0
          %536 = vmatprep.subr.mxu0 0.0
          %537 = vmatpush1.msra.mxu0 0.0
          %538 = vmatprep.subr.mxu0 0.0
          %539 = vmatpush1.msra.mxu0 0.0
          %540 = vmatprep.subr.mxu0 0.0
          %541 = vmatpush1.msra.mxu0 0.0
          %542 = vmatprep.mubr.f32.mxu0 0.0
          %543 = vmatmul.mubr.f32.gmra.mrb[0].mxu0 %v431
          %v544 = vpop.f32.mrb[0].mxu0
          %v545 = vadd.f32 %v395, %v544
          %v546 = vpop.f32.mrb[0].mxu0
          %547 = vmatprep.mubr.f32.mxu0 0.0
          %548 = vmatmul.mubr.f32.gmra.mrb[0].mxu0 %v434
          %v549 = vpop.f32.mrb[0].mxu0
          %v550 = vadd.f32 %v395, %v549
          %v551 = vpop.f32.mrb[0].mxu0
          %552 = vmatprep.mubr.f32.mxu0 0.0
          %553 = vmatmul.mubr.f32.gmra.mrb[0].mxu0 %v437
          %v554 = vpop.f32.mrb[0].mxu0
          %v555 = vadd.f32 %v395, %v554
          %v556 = vpop.f32.mrb[0].mxu0
          %557 = vmatprep.mubr.f32.mxu0 0.0
          %558 = vmatmul.mubr.f32.gmra.mrb[0].mxu0 %v440
          %v559 = vpop.f32.mrb[0].mxu0
          %v560 = vadd.f32 %v395, %v559
          %v561 = vpop.f32.mrb[0].mxu0
          %562 = vmatprep.mubr.f32.mxu0 0.0
          %563 = vmatmul.mubr.f32.gmra.mrb[0].mxu0 %v443
          %v564 = vpop.f32.mrb[0].mxu0
          %v565 = vadd.f32 %v395, %v564
          %v566 = vpop.f32.mrb[0].mxu0
          %567 = vmatprep.mubr.f32.mxu0 0.0
          %568 = vmatmul.mubr.f32.gmra.mrb[0].mxu0 %v446
          %v569 = vpop.f32.mrb[0].mxu0
          %v570 = vadd.f32 %v395, %v569
          %v571 = vpop.f32.mrb[0].mxu0
          %572 = vmatprep.mubr.f32.mxu0 0.0
          %573 = vmatmul.mubr.f32.gmra.mrb[0].mxu0 %v449
          %v574 = vpop.f32.mrb[0].mxu0
          %v575 = vadd.f32 %v395, %v574
          %v576 = vpop.f32.mrb[0].mxu0
          %577 = vmatprep.mubr.f32.mxu0 0.0
          %578 = vmatmul.mubr.f32.gmra.mrb[0].mxu0 %v452
          %v579 = vpop.f32.mrb[0].mxu0
          %v580 = vadd.f32 %v395, %v579
          %v581 = vpop.f32.mrb[0].mxu0
          %582 = vmatprep.mubr.f32.mxu0 0.0
          %583 = vmatmul.mubr.f32.gmra.mrb[0].mxu0 %v455
          %v584 = vpop.f32.mrb[0].mxu0
          %v585 = vadd.f32 %v395, %v584
          %v586 = vpop.f32.mrb[0].mxu0
          %587 = vmatprep.mubr.f32.mxu0 0.0
          %588 = vmatmul.mubr.f32.gmra.mrb[0].mxu0 %v458
          %v589 = vpop.f32.mrb[0].mxu0
          %v590 = vadd.f32 %v395, %v589
          %v591 = vpop.f32.mrb[0].mxu0
          %592 = vmatprep.mubr.f32.mxu0 0.0
          %593 = vmatmul.mubr.f32.gmra.mrb[0].mxu0 %v461
          %v594 = vpop.f32.mrb[0].mxu0
          %v595 = vadd.f32 %v395, %v594
          %v596 = vpop.f32.mrb[0].mxu0
          %597 = vmatprep.mubr.f32.mxu0 0.0
          %598 = vmatmul.mubr.f32.gmra.mrb[0].mxu0 %v464
          %v599 = vpop.f32.mrb[0].mxu0
          %v600 = vadd.f32 %v395, %v599
          %v601 = vpop.f32.mrb[0].mxu0
          %602 = vmatprep.mubr.f32.mxu0 0.0
          %603 = vmatmul.mubr.f32.gmra.mrb[0].mxu0 %v467
          %v604 = vpop.f32.mrb[0].mxu0
          %v605 = vadd.f32 %v395, %v604
          %v606 = vpop.f32.mrb[0].mxu0
          %607 = vmatprep.mubr.f32.mxu0 0.0
          %608 = vmatmul.mubr.f32.gmra.mrb[0].mxu0 %v470
          %v609 = vpop.f32.mrb[0].mxu0
          %v610 = vadd.f32 %v395, %v609
          %v611 = vpop.f32.mrb[0].mxu0
          %612 = vmatprep.mubr.f32.mxu0 0.0
          %613 = vmatmul.mubr.f32.gmra.mrb[0].mxu0 %v473
          %v614 = vpop.f32.mrb[0].mxu0
          %v615 = vadd.f32 %v395, %v614
          %v616 = vpop.f32.mrb[0].mxu0
          %617 = vmatprep.mubr.f32.mxu0 0.0
          %618 = vmatmul.mubr.f32.gmra.mrb[0].mxu0 %v476
          %v619 = vpop.f32.mrb[0].mxu0
          %v620 = vadd.f32 %v395, %v619
          %v621 = vpop.f32.mrb[0].mxu0
          %622 = vdwg.mxu0
          %623 = vmax.xlane.f32.xlu0 %v545
          %v624 = vpop.xlane.xlu0 %623
          %625 = vmax.xlane.f32.xlu0 %v550
          %v626 = vpop.xlane.xlu0 %625
          %627 = vmax.xlane.f32.xlu0 %v555
          %v628 = vpop.xlane.xlu0 %627
          %629 = vmax.xlane.f32.xlu0 %v560
          %v630 = vpop.xlane.xlu0 %629
          %631 = vmax.xlane.f32.xlu0 %v565
          %v632 = vpop.xlane.xlu0 %631
          %633 = vmax.xlane.f32.xlu0 %v570
          %v634 = vpop.xlane.xlu0 %633
          %635 = vmax.xlane.f32.xlu0 %v575
          %v636 = vpop.xlane.xlu0 %635
          %637 = vmax.xlane.f32.xlu0 %v580
          %v638 = vpop.xlane.xlu0 %637
          %639 = vmax.xlane.f32.xlu0 %v585
          %v640 = vpop.xlane.xlu0 %639
          %641 = vmax.xlane.f32.xlu0 %v590
          %v642 = vpop.xlane.xlu0 %641
          %643 = vmax.xlane.f32.xlu0 %v595
          %v644 = vpop.xlane.xlu0 %643
          %645 = vmax.xlane.f32.xlu0 %v600
          %v646 = vpop.xlane.xlu0 %645
          %647 = vmax.xlane.f32.xlu0 %v605
          %v648 = vpop.xlane.xlu0 %647
          %649 = vmax.xlane.f32.xlu0 %v610
          %v650 = vpop.xlane.xlu0 %649
          %651 = vmax.xlane.f32.xlu0 %v615
          %v652 = vpop.xlane.xlu0 %651
          %653 = vmax.xlane.f32.xlu0 %v620
          %v654 = vpop.xlane.xlu0 %653
          %v655 = vsub.f32 %v545, %v624
          %v656 = vsub.f32 %v550, %v626
          %v657 = vsub.f32 %v555, %v628
          %v658 = vsub.f32 %v560, %v630
          %v659 = vsub.f32 %v565, %v632
          %v660 = vsub.f32 %v570, %v634
          %v661 = vsub.f32 %v575, %v636
          %v662 = vsub.f32 %v580, %v638
          %v663 = vsub.f32 %v585, %v640
          %v664 = vsub.f32 %v590, %v642
          %v665 = vsub.f32 %v595, %v644
          %v666 = vsub.f32 %v600, %v646
          %v667 = vsub.f32 %v605, %v648
          %v668 = vsub.f32 %v610, %v650
          %v669 = vsub.f32 %v615, %v652
          %v670 = vsub.f32 %v620, %v654
          %v671 = vmul.f32 %v655, 1.442695
          %v672 = vpow.pop %v671
          %v673 = vmul.f32 %v656, 1.442695
          %v674 = vpow.pop %v673
          %v675 = vmul.f32 %v657, 1.442695
          %v676 = vpow.pop %v675
          %v677 = vmul.f32 %v658, 1.442695
          %v678 = vpow.pop %v677
          %v679 = vmul.f32 %v659, 1.442695
          %v680 = vpow.pop %v679
          %v681 = vmul.f32 %v660, 1.442695
          %v682 = vpow.pop %v681
          %v683 = vmul.f32 %v661, 1.442695
          %v684 = vpow.pop %v683
          %v685 = vmul.f32 %v662, 1.442695
          %v686 = vpow.pop %v685
          %v687 = vmul.f32 %v663, 1.442695
          %v688 = vpow.pop %v687
          %v689 = vmul.f32 %v664, 1.442695
          %v690 = vpow.pop %v689
          %v691 = vmul.f32 %v665, 1.442695
          %v692 = vpow.pop %v691
          %v693 = vmul.f32 %v666, 1.442695
          %v694 = vpow.pop %v693
          %v695 = vmul.f32 %v667, 1.442695
          %v696 = vpow.pop %v695
          %v697 = vmul.f32 %v668, 1.442695
          %v698 = vpow.pop %v697
          %v699 = vmul.f32 %v669, 1.442695
          %v700 = vpow.pop %v699
          %v701 = vmul.f32 %v670, 1.442695
          %v702 = vpow.pop %v701
          %703 = vadd.xlane.f32.xlu0 %v672
          %v704 = vpop.xlane.xlu0 %703
          %705 = vadd.xlane.f32.xlu0 %v674
          %v706 = vpop.xlane.xlu0 %705
          %707 = vadd.xlane.f32.xlu0 %v676
          %v708 = vpop.xlane.xlu0 %707
          %709 = vadd.xlane.f32.xlu0 %v678
          %v710 = vpop.xlane.xlu0 %709
          %711 = vadd.xlane.f32.xlu0 %v680
          %v712 = vpop.xlane.xlu0 %711
          %713 = vadd.xlane.f32.xlu0 %v682
          %v714 = vpop.xlane.xlu0 %713
          %715 = vadd.xlane.f32.xlu0 %v684
          %v716 = vpop.xlane.xlu0 %715
          %717 = vadd.xlane.f32.xlu0 %v686
          %v718 = vpop.xlane.xlu0 %717
          %719 = vadd.xlane.f32.xlu0 %v688
          %v720 = vpop.xlane.xlu0 %719
          %721 = vadd.xlane.f32.xlu0 %v690
          %v722 = vpop.xlane.xlu0 %721
          %723 = vadd.xlane.f32.xlu0 %v692
          %v724 = vpop.xlane.xlu0 %723
          %725 = vadd.xlane.f32.xlu0 %v694
          %v726 = vpop.xlane.xlu0 %725
          %727 = vadd.xlane.f32.xlu0 %v696
          %v728 = vpop.xlane.xlu0 %727
          %729 = vadd.xlane.f32.xlu0 %v698
          %v730 = vpop.xlane.xlu0 %729
          %731 = vadd.xlane.f32.xlu0 %v700
          %v732 = vpop.xlane.xlu0 %731
          %733 = vadd.xlane.f32.xlu0 %v702
          %v734 = vpop.xlane.xlu0 %733
          %v735 = vrcp.pop %v704
          %v736 = vmul.f32 %v672, %v735
          %v737 = vrcp.pop %v706
          %v738 = vmul.f32 %v674, %v737
          %v739 = vrcp.pop %v708
          %v740 = vmul.f32 %v676, %v739
          %v741 = vrcp.pop %v710
          %v742 = vmul.f32 %v678, %v741
          %v743 = vrcp.pop %v712
          %v744 = vmul.f32 %v680, %v743
          %v745 = vrcp.pop %v714
          %v746 = vmul.f32 %v682, %v745
          %v747 = vrcp.pop %v716
          %v748 = vmul.f32 %v684, %v747
          %v749 = vrcp.pop %v718
          %v750 = vmul.f32 %v686, %v749
          %v751 = vrcp.pop %v720
          %v752 = vmul.f32 %v688, %v751
          %v753 = vrcp.pop %v722
          %v754 = vmul.f32 %v690, %v753
          %v755 = vrcp.pop %v724
          %v756 = vmul.f32 %v692, %v755
          %v757 = vrcp.pop %v726
          %v758 = vmul.f32 %v694, %v757
          %v759 = vrcp.pop %v728
          %v760 = vmul.f32 %v696, %v759
          %v761 = vrcp.pop %v730
          %v762 = vmul.f32 %v698, %v761
          %v763 = vrcp.pop %v732
          %v764 = vmul.f32 %v700, %v763
          %v765 = vrcp.pop %v734
          %v766 = vmul.f32 %v702, %v765
          %767 = vmatprep.subr.mxu0 0.0
          %768 = vmatpush1.xpose.msra.mxu0 %v736
          %769 = vmatprep.subr.mxu0 0.0
          %770 = vmatpush1.xpose.msra.mxu0 %v738
          %771 = vmatprep.subr.mxu0 0.0
          %772 = vmatpush1.xpose.msra.mxu0 %v740
          %773 = vmatprep.subr.mxu0 0.0
          %774 = vmatpush1.xpose.msra.mxu0 %v742
          %775 = vmatprep.subr.mxu0 0.0
          %776 = vmatpush1.xpose.msra.mxu0 %v744
          %777 = vmatprep.subr.mxu0 0.0
          %778 = vmatpush1.xpose.msra.mxu0 %v746
          %779 = vmatprep.subr.mxu0 0.0
          %780 = vmatpush1.xpose.msra.mxu0 %v748
          %781 = vmatprep.subr.mxu0 0.0
          %782 = vmatpush1.xpose.msra.mxu0 %v750
          %783 = vmatprep.subr.mxu0 0.0
          %784 = vmatpush1.xpose.msra.mxu0 %v752
          %785 = vmatprep.subr.mxu0 0.0
          %786 = vmatpush1.xpose.msra.mxu0 %v754
          %787 = vmatprep.subr.mxu0 0.0
          %788 = vmatpush1.xpose.msra.mxu0 %v756
          %789 = vmatprep.subr.mxu0 0.0
          %790 = vmatpush1.xpose.msra.mxu0 %v758
          %791 = vmatprep.subr.mxu0 0.0
          %792 = vmatpush1.xpose.msra.mxu0 %v760
          %793 = vmatprep.subr.mxu0 0.0
          %794 = vmatpush1.xpose.msra.mxu0 %v762
          %795 = vmatprep.subr.mxu0 0.0
          %796 = vmatpush1.xpose.msra.mxu0 %v764
          %797 = vmatprep.subr.mxu0 0.0
          %798 = vmatpush1.xpose.msra.mxu0 %v766
          %799 = vmatprep.subr.mxu0 0.0
          %800 = vmatpush1.xpose.msra.mxu0 0.0
          %801 = vmatprep.subr.mxu0 0.0
          %802 = vmatpush1.xpose.msra.mxu0 0.0
          %803 = vmatprep.subr.mxu0 0.0
          %804 = vmatpush1.xpose.msra.mxu0 0.0
          %805 = vmatprep.subr.mxu0 0.0
          %806 = vmatpush1.xpose.msra.mxu0 0.0
          %807 = vmatprep.subr.mxu0 0.0
          %808 = vmatpush1.xpose.msra.mxu0 0.0
          %809 = vmatprep.subr.mxu0 0.0
          %810 = vmatpush1.xpose.msra.mxu0 0.0
          %811 = vmatprep.subr.mxu0 0.0
          %812 = vmatpush1.xpose.msra.mxu0 0.0
          %813 = vmatprep.subr.mxu0 0.0
          %814 = vmatpush1.xpose.msra.mxu0 0.0
          %815 = vmatprep.subr.mxu0 0.0
          %816 = vmatpush1.xpose.msra.mxu0 0.0
          %817 = vmatprep.subr.mxu0 0.0
          %818 = vmatpush1.xpose.msra.mxu0 0.0
          %819 = vmatprep.subr.mxu0 0.0
          %820 = vmatpush1.xpose.msra.mxu0 0.0
          %821 = vmatprep.subr.mxu0 0.0
          %822 = vmatpush1.xpose.msra.mxu0 0.0
          %823 = vmatprep.subr.mxu0 0.0
          %824 = vmatpush1.xpose.msra.mxu0 0.0
          %825 = vmatprep.subr.mxu0 0.0
          %826 = vmatpush1.xpose.msra.mxu0 0.0
          %827 = vmatprep.subr.mxu0 0.0
          %828 = vmatpush1.xpose.msra.mxu0 0.0
          %829 = vmatprep.subr.mxu0 0.0
          %830 = vmatpush1.xpose.msra.mxu0 0.0
          %831 = vmatprep.mubr.f32.mxu0 0.0
          %832 = vmatmul.mubr.f32.gmra.mrb[0].mxu0 %v390
          %v833 = vpop.f32.mrb[0].mxu0
          %v834 = vadd.f32 0.0, %v833
          %v835 = vpop.f32.mrb[0].mxu0
          %836 = vdwg.mxu0
          %s837 = scalar_lea.vmem %s174, %s382 [#allocation3]
          %838 = vst [vmem:[%s837] sm:$0xff] %v834
        $region37: #{tpu_custom_call.1} parent=31 // loop_footer
          %s381 = sadd.s32 1, %s377
        $region38: #{tpu_custom_call.1} parent=31 // loop_footer_branch
          %376 = sbr.rel target = $region34
        $region39: #{tpu_custom_call.1} parent=31 // loop_exit
          _
        %s839 = sand.u32 %s98, 1
        %s840 = scalar_lea.sflag [#allocation4], %s839
        %s841 = sand.u32 %s98, 1
        %s842 = smul.addr %s841, 32
        %s843 = scalar_lea.vmem [#allocation3], %s842
        // Predicated region
        $region40: #{tpu_custom_call.1} parent=31 // pred_check
          %p844 = pneg %p108
        $region41: #{tpu_custom_call.1} parent=31 // pred_check_branch
          %846 = sbr.rel (%p844) target = $region43
        $region42: #{tpu_custom_call.1} parent=31 // pred_region
          %s848 = ssub.s32 512, 512
          %849 = vsyncadd %s840, %s848
          %s850 = smul.addr %s17, 4
          %s851 = smul.addr %s850, 128
          %s852 = scalar_lea.hbm %s3, %s851
          %s853 = sshll.u32 %s843, 4
          %s854 = int_to_ptr.vmem [resolvable:$true] %s853
          %859 = dma.vmem_to_hbm [thread:$0]  %s854, 512, %s852, %s840, 128, 128, 8
        $region43: #{tpu_custom_call.1} parent=31 // pred_fallthru
          _
      $region32: #{tpu_custom_call.1} parent=5 // pred_fallthru
        _
      %p860 = scmp.le.s32.totalorder 2, %s12
      // Predicated region
      $region44: #{tpu_custom_call.1} parent=5 // pred_check
        %p861 = pneg %p860
      $region45: #{tpu_custom_call.1} parent=5 // pred_check_branch
        %863 = sbr.rel (%p861) target = $region47
      $region46: #{tpu_custom_call.1} parent=5 // pred_region
        %s864 = ssub.s32 %s12, 2
        // Predicated region
        $region48: #{tpu_custom_call.1} parent=46 // pred_check
          %p865 = pneg %p114
        $region49: #{tpu_custom_call.1} parent=46 // pred_check_branch
          %867 = sbr.rel (%p865) target = $region51
        $region50: #{tpu_custom_call.1} parent=46 // pred_region
          %s868 = sand.u32 %s99, 1
          %s869 = scalar_lea.sflag [#allocation4], %s868
          %s870 = sand.u32 %s99, 1
          %s871 = smul.addr %s870, 32
          %s872 = scalar_lea.vmem [#allocation3], %s871
          %873 = dma.done %s869, 512
        $region51: #{tpu_custom_call.1} parent=46 // pred_fallthru
          _
      $region47: #{tpu_custom_call.1} parent=5 // pred_fallthru
        _
    $region6: #{tpu_custom_call.1} parent=1 // loop_footer
      %s16 = sadd.s32 1, %s12
    $region7: #{tpu_custom_call.1} parent=1 // loop_footer_branch
      %11 = sbr.rel target = $region3
    $region8: #{tpu_custom_call.1} parent=1 // loop_exit
      _
    %874 = vsyncpa [#allocation4], 1
    %s875 = scalar_lea.sflag [#allocation4], 1
    %876 = vsyncpa %s875, 1

</llo_original>
